<compile_context>
chip_gen: v7x
topology: tpu7x:2x2x1
jax: 0.10.0
libtpu: 0.0.40
codegen_flags: <defaults>
</compile_context>

<pallas_src>
import jax
import jax.numpy as jnp
from jax.experimental import pallas as pl
from jax.experimental.pallas import tpu as pltpu

_TARGET_BLOCK_BYTES = 1 << 20  # ~1 MiB per block; x4 (double-buffered in+out) = ~4 MiB VMEM


def _identity_kernel(x_ref, o_ref):
    # hot path: whole-tile VMEM copy (identity)
    o_ref[...] = x_ref[...]


def _pick_2d_shape(x):
    """Lane-dense (rows, cols) flatten: cols is a large multiple of 128 when possible."""
    total = int(x.size)
    for cols in (4096, 2048, 1024, 512, 256, 128):
        if total % cols == 0:
            return total // cols, cols
    # Fallback (total not divisible by 128): keep the original trailing dim.
    # Block last dim == full array dim stays a legal TPU block shape.
    last = int(x.shape[-1])
    return total // last, last


def _identity_pallas_2d(x2d):
    rows, cols = x2d.shape
    itemsize = x2d.dtype.itemsize
    # Rows per block: aim for ~1 MiB, multiple of 8 (sublane), capped at full rows.
    tile_r = max(8, (_TARGET_BLOCK_BYTES // max(1, cols * itemsize)) // 8 * 8)
    if tile_r >= rows:
        tile_r = rows  # single full-extent block along rows (always legal)
    grid_r = pl.cdiv(rows, tile_r)
    nbytes = rows * cols * itemsize
    return pl.pallas_call(
        _identity_kernel,
        out_shape=jax.ShapeDtypeStruct((rows, cols), x2d.dtype),
        grid=(grid_r,),
        in_specs=[pl.BlockSpec((tile_r, cols), lambda i: (i, 0))],
        out_specs=pl.BlockSpec((tile_r, cols), lambda i: (i, 0)),
        # Identity op: let XLA reuse the input buffer for the output (P8).
        input_output_aliases={0: 0},
        compiler_params=pltpu.CompilerParams(
            dimension_semantics=("parallel",),
        ),
        cost_estimate=pl.CostEstimate(
            flops=0, transcendentals=0, bytes_accessed=2 * nbytes),
    )(x2d)


class ShapePrinter:
    """JAX/Pallas equivalent of the PyTorch ShapePrinter module.

    forward(x): prints the shape (once, if once=True) and returns x unchanged.
    The identity is realized by a tiled, lane-dense Pallas copy whose output is
    aliased to its input.

    Note: under jit the host-side print fires at trace time only, so repeated
    calls with the same shape will not re-print even with once=False (documented
    divergence from PyTorch eager semantics).
    """

    def __init__(self, name="ShapePrinter", once=True):
        self.name = name
        self.once = once
        self.done = False

    def __call__(self, x):
        if not self.done:
            # Shape is static at trace time, so a host-side print reproduces
            # the PyTorch semantics.
            print(f"Shape printer '{self.name}' -> {list(x.shape)}")
        if self.once:
            self.done = True

        # Degenerate inputs: a kernel launch buys nothing; identity is exact.
        if x.ndim == 0 or x.size == 0:
            return x

        orig_shape = x.shape
        rows, cols = _pick_2d_shape(x)
        y2d = _identity_pallas_2d(x.reshape(rows, cols))
        return y2d.reshape(orig_shape)


if __name__ == "__main__":
    key = jax.random.PRNGKey(0)
    # NCHW input consistent with a DCGAN feature map: batch=2, channels=4, 16x16
    x = jax.random.normal(key, (2, 4, 16, 16), dtype=jnp.float32)

    printer = ShapePrinter(name="ShapePrinter", once=True)
    y = jax.block_until_ready(printer(x))

    # identity check
    assert y.shape == x.shape and y.dtype == x.dtype
    assert bool(jnp.all(y == x))

    # second call should NOT print again (once=True semantics)
    y2 = jax.block_until_ready(printer(x))
    assert bool(jnp.all(y2 == x))

    print("KERNEL_OK")
</pallas_src>

<mosaic_0001>
module attributes {stable_mosaic.version = 11 : i64} {
  func.func @_identity_kernel(%arg0: i32, %arg1: memref<1x2048xf32, #tpu.memory_space<vmem>>, %arg2: memref<1x2048xf32, #tpu.memory_space<vmem>>) attributes {dimension_semantics = [#tpu.dimension_semantics<parallel>], iteration_bounds = array<i64: 1>, scalar_prefetch = 0 : i64, scratch_operands = 0 : i64, tpu.core_type = #tpu.core_type<tc>, window_params = [{transform_indices = @transform_0, window_bounds = array<i64: 1, 2048>}, {transform_indices = @transform_1, window_bounds = array<i64: 1, 2048>}]} {
    %c0 = arith.constant 0 : index
    %c0_0 = arith.constant 0 : index
    %0 = vector.load %arg1[%c0, %c0_0] : memref<1x2048xf32, #tpu.memory_space<vmem>>, vector<1x2048xf32>
    %c0_1 = arith.constant 0 : index
    %c0_2 = arith.constant 0 : index
    %1 = vector.load %arg2[%c0_1, %c0_2] : memref<1x2048xf32, #tpu.memory_space<vmem>>, vector<1x2048xf32>
    tpu.vector_store %arg2[%c0_1, %c0_2], %0 {strides = array<i32>} : memref<1x2048xf32, #tpu.memory_space<vmem>>, vector<1x2048xf32>,
    return
  }
  func.func @transform_0(%arg0: i32) -> (i32, i32) {
    %c0_i32 = arith.constant 0 : i32
    %c0_i32_0 = arith.constant 0 : i32
    return %arg0, %c0_i32 : i32, i32
  }
  func.func @transform_1(%arg0: i32) -> (i32, i32) {
    %c0_i32 = arith.constant 0 : i32
    %c0_i32_0 = arith.constant 0 : i32
    return %arg0, %c0_i32 : i32, i32
  }
}

</mosaic_0001>

<llo_original>
// kernel: tpu_custom_call.1
$region0: #{tpu_custom_call.1}
  #allocation0 [shape = 'u32[]', space=smem, size = 0x4, offset = 0x4, fixed_abs, tag = 'smem constant byte address 0x4 - core index']
  #allocation1 [shape = 'u32[144,128]{1,0:T(1,128)}', space=vmem, size = 0x12000, scoped, tag = 'internal scratch']
  %s0 = inlined_call_operand.hbm [shape: f32[1,2048], index: 0, kind: input, shape index: {}, may-alias: {0,1}]
  %s1 = inlined_call_operand.hbm [shape: f32[1,2048], index: 1, kind: output, shape index: {}, may-alias: {0,1}]
  %s2 = sld [smem:[#allocation0]]
  $region18: #{tpu_custom_call.1} parent=0
    _
  %s4 = ssub.s32 1, %s2
  %s5 = scalar_select 0, %s4, %s2
  $region1: #{tpu_custom_call.1} parent=0
    #allocation2 [shape = 'u8[8192]{0}', space=vmem, size = 0x2000, scoped, tag = 'input window, operand 0, single buffered']
    #allocation3 [shape = 's32[1]{0}', space=sflag, size = 0x4, scoped, tag = 'scoped memory for tpu_custom_call.1']
    #allocation4 [shape = 's32[1]{0}', space=sflag, size = 0x4, scoped, tag = 'scoped memory for tpu_custom_call.1']
    #allocation5 [shape = 'u8[8192]{0}', space=vmem, size = 0x2000, scoped, tag = 'output window, operand 0, single buffered']
    %6 = vsyncpa [#allocation3], 0
    %7 = vsyncpa [#allocation4], 0
    // Predicated region
    $region2: #{tpu_custom_call.1} parent=1 // pred_check
      _
    $region3: #{tpu_custom_call.1} parent=1 // pred_check_branch
      %9 = sbr.rel (0) target = $region5
    $region4: #{tpu_custom_call.1} parent=1 // pred_region
      %s11 = ssub.s32 256, 256
      %12 = vsyncadd [#allocation3], %s11
      %s14 = sshll.u32 [#allocation2], 4
      %s15 = int_to_ptr.vmem [resolvable:$true] %s14
      %17 = dma.hbm_to_vmem [thread:$0]  %s0, 256, %s15, [#allocation3]
    $region5: #{tpu_custom_call.1} parent=1 // pred_fallthru
      _
    // Predicated region
    $region6: #{tpu_custom_call.1} parent=1 // pred_check
      _
    $region7: #{tpu_custom_call.1} parent=1 // pred_check_branch
      %19 = sbr.rel (0) target = $region9
    $region8: #{tpu_custom_call.1} parent=1 // pred_region
      %20 = dma.done [#allocation3], 256
    $region9: #{tpu_custom_call.1} parent=1 // pred_fallthru
      _
    %v21 = vld [vmem:[#allocation2] sm:$0xff]
    %v22 = vld [vmem:[#allocation2 + $0x8] sm:$0xff]
    %23 = vst [vmem:[#allocation5] sm:$0xff] %v21
    %24 = vst [vmem:[#allocation5 + $0x8] sm:$0xff] %v22
    // Predicated region
    $region10: #{tpu_custom_call.1} parent=1 // pred_check
      _
    $region11: #{tpu_custom_call.1} parent=1 // pred_check_branch
      %26 = sbr.rel (0) target = $region13
    $region12: #{tpu_custom_call.1} parent=1 // pred_region
      %s28 = ssub.s32 256, 256
      %29 = vsyncadd [#allocation4], %s28
      %s31 = sshll.u32 [#allocation5], 4
      %s32 = int_to_ptr.vmem [resolvable:$true] %s31
      %34 = dma.vmem_to_hbm [thread:$0]  %s32, 256, %s1, [#allocation4]
    $region13: #{tpu_custom_call.1} parent=1 // pred_fallthru
      _
    // Predicated region
    $region14: #{tpu_custom_call.1} parent=1 // pred_check
      _
    $region15: #{tpu_custom_call.1} parent=1 // pred_check_branch
      %36 = sbr.rel (0) target = $region17
    $region16: #{tpu_custom_call.1} parent=1 // pred_region
      %37 = dma.done [#allocation4], 256
    $region17: #{tpu_custom_call.1} parent=1 // pred_fallthru
      _
    %38 = vsyncpa [#allocation3], 1
    %39 = vsyncpa [#allocation4], 1

</llo_original>
